<compile_context>
chip_gen: v5e
topology: v5e:2x2
jax: 0.10.0
libtpu: 0.0.40
codegen_flags: <defaults>
</compile_context>

<pallas_src>
import jax
import jax.numpy as jnp
from jax.experimental import pallas as pl
from jax.experimental.pallas import tpu as pltpu

_MIB = 1024 * 1024


def _round_up(x: int, n: int) -> int:
    return (x + n - 1) // n * n


def _vmem_budget_bytes() -> int:
    """Generation-aware VMEM budget: physical VMEM minus headroom for compiler
    internal scratch (v7x has only 64 MiB/TC; v5e/v6e have 128 MiB)."""
    try:
        phys = int(pltpu.get_tpu_info().vmem_capacity_bytes)
        return min(max(32 * _MIB, phys - 16 * _MIB), 112 * _MIB)
    except Exception:
        return 64 * _MIB  # conservative fallback, safe on every generation


# ----------------------------- kernels ------------------------------------


def _mlp_kernel_resident(x_ref, w1_ref, b1_ref, w2_ref, b2_ref, o_ref):
    # x tile is f32 in HBM (read once per row tile); cast to compute dtype here.
    xb = x_ref[...].astype(w1_ref.dtype)
    h = jnp.dot(xb, w1_ref[...], preferred_element_type=jnp.float32)
    h = jnp.maximum(h + b1_ref[...], 0.0)
    y = jnp.dot(h.astype(w2_ref.dtype), w2_ref[...],
                preferred_element_type=jnp.float32)
    o_ref[...] = (y + b2_ref[...]).astype(o_ref.dtype)


def _mlp_kernel_stream(x_ref, w1_ref, b1_ref, w2_ref, b2_ref, o_ref, acc_ref):
    k = pl.program_id(1)

    @pl.when(k == 0)
    def _():
        # Bias init: the zero-fill write we'd pay anyway becomes the b2 add.
        acc_ref[...] = jnp.broadcast_to(b2_ref[...], acc_ref.shape)

    xb = x_ref[...].astype(w1_ref.dtype)
    h = jnp.dot(xb, w1_ref[...], preferred_element_type=jnp.float32)
    h = jnp.maximum(h + b1_ref[...], 0.0)
    acc_ref[...] += jnp.dot(h.astype(w2_ref.dtype), w2_ref[...],
                            preferred_element_type=jnp.float32)

    @pl.when(k == pl.num_programs(1) - 1)
    def _():
        o_ref[...] = acc_ref[...].astype(o_ref.dtype)


# ----------------------------- wrappers ------------------------------------


def prepare_mlp_params(w1, b1, w2, b2, *, compute_dtype=jnp.bfloat16, tk=512):
    """One-time weight prep (hoisted out of the forward path): pad feature dims
    to lane multiples (128), pre-transpose to (in, out), cast to compute dtype.
    PyTorch nn.Linear layout: w1 (H, D_in), b1 (H,), w2 (D_out, H), b2 (D_out,).
    Zero padding is exact for this MLP (padded b1 = 0, ReLU(0) = 0, padded W2
    rows = 0)."""
    hidden, d_in = w1.shape
    d_out = w2.shape[0]

    d_in_p = _round_up(d_in, 128)
    d_out_p = _round_up(d_out, 128)
    h_p = _round_up(hidden, 128)

    # Hidden tile for the streaming path: prefer few k-steps, then minimal zero
    # padding, then the largest tile.  Hidden is padded up to a multiple of the
    # chosen tile here, so the forward path never re-pads weights.
    tk_cap = min(_round_up(tk, 128), h_p)
    candidates = range(128, tk_cap + 1, 128)
    tk_eff = min(candidates,
                 key=lambda c: (pl.cdiv(h_p, c), _round_up(h_p, c), -c))
    h_p = _round_up(h_p, tk_eff)

    w1t = jnp.pad(w1.T, ((0, d_in_p - d_in), (0, h_p - hidden))).astype(compute_dtype)
    w2t = jnp.pad(w2.T, ((0, h_p - hidden), (0, d_out_p - d_out))).astype(compute_dtype)
    b1r = jnp.pad(b1, (0, h_p - hidden)).reshape(1, h_p).astype(jnp.float32)
    b2r = jnp.pad(b2, (0, d_out_p - d_out)).reshape(1, d_out_p).astype(jnp.float32)

    return dict(w1t=w1t, b1r=b1r, w2t=w2t, b2r=b2r,
                d_in=d_in, d_out=d_out, tk_eff=tk_eff)


def mlp_apply(x, params, *, tm=512, force_streaming=False, out_dtype=None):
    """y = relu(x @ W1.T + b1) @ W2.T + b2 with bf16 MXU operands, f32 accum."""
    w1t, b1r = params["w1t"], params["b1r"]
    w2t, b2r = params["w2t"], params["b2r"]
    d_in, d_out, tk_eff = params["d_in"], params["d_out"], params["tk_eff"]
    d_in_p, h_p = w1t.shape
    d_out_p = w2t.shape[1]
    lead = x.shape[:-1]
    assert x.shape[-1] == d_in

    out_dtype = x.dtype if out_dtype is None else out_dtype
    x_bytes = jnp.dtype(x.dtype).itemsize
    o_bytes = jnp.dtype(out_dtype).itemsize
    w_bytes = jnp.dtype(w1t.dtype).itemsize

    x2 = x.reshape(-1, d_in)
    m = x2.shape[0]

    vmem_limit = _vmem_budget_bytes()
    weight_bytes = (d_in_p * h_p + h_p * d_out_p) * w_bytes
    bias_bytes = (h_p + d_out_p) * 4

    # Resident-weights fast path when both padded bf16 weight matrices (Pallas
    # double-buffers every input, hence 2x) leave >=40% of VMEM for activations.
    resident = (not force_streaming) and (
        2 * (weight_bytes + bias_bytes) <= int(0.6 * vmem_limit))

    def resident_vmem(tm_):
        return (2 * (weight_bytes + bias_bytes)
                + 2 * tm_ * d_in_p * x_bytes
                + 2 * tm_ * d_out_p * o_bytes
                + tm_ * (h_p + d_out_p) * 4)          # f32 temporaries

    def stream_vmem(tm_):
        return (2 * (d_in_p * tk_eff + tk_eff * d_out_p) * w_bytes
                + 2 * bias_bytes
                + 2 * tm_ * d_in_p * x_bytes
                + 2 * tm_ * d_out_p * o_bytes
                + tm_ * d_out_p * 4                    # f32 accumulator scratch
                + tm_ * (tk_eff + d_out_p) * 4)        # f32 temporaries

    est = resident_vmem if resident else stream_vmem

    # Row tile: start big (amortizes the weight stream, fills the MXU) and
    # halve until it fits the generation's VMEM budget.
    tm_eff = min(tm, _round_up(m, 8))
    while tm_eff > 128 and est(tm_eff) > int(0.85 * vmem_limit):
        tm_eff = _round_up(max(tm_eff // 2, 8), 8)
    m_p = _round_up(m, tm_eff)
    grid_i = m_p // tm_eff

    if (m_p, d_in_p) == x2.shape:
        x2p = x2
    else:
        x2p = jnp.pad(x2, ((0, m_p - m), (0, d_in_p - d_in)))

    flops = 2 * m_p * (d_in_p * h_p + h_p * d_out_p)

    if resident:
        cost = pl.CostEstimate(
            flops=flops, transcendentals=0,
            bytes_accessed=(m_p * d_in_p * x_bytes
                            + weight_bytes + bias_bytes       # weights DMA'd once
                            + m_p * d_out_p * o_bytes))
        out = pl.pallas_call(
            _mlp_kernel_resident,
            out_shape=jax.ShapeDtypeStruct((m_p, d_out_p), out_dtype),
            grid_spec=pltpu.PrefetchScalarGridSpec(
                num_scalar_prefetch=0,
                grid=(grid_i,),
                in_specs=[
                    pl.BlockSpec((tm_eff, d_in_p), lambda i: (i, 0)),   # x rows
                    pl.BlockSpec((d_in_p, h_p), lambda i: (0, 0)),      # W1 (resident)
                    pl.BlockSpec((1, h_p), lambda i: (0, 0)),           # b1
                    pl.BlockSpec((h_p, d_out_p), lambda i: (0, 0)),     # W2 (resident)
                    pl.BlockSpec((1, d_out_p), lambda i: (0, 0)),       # b2
                ],
                out_specs=pl.BlockSpec((tm_eff, d_out_p), lambda i: (i, 0)),
            ),
            compiler_params=pltpu.CompilerParams(
                dimension_semantics=("parallel",),
                vmem_limit_bytes=vmem_limit),
            cost_estimate=cost,
        )(x2p, w1t, b1r, w2t, b2r)
    else:
        grid_k = h_p // tk_eff
        cost = pl.CostEstimate(
            flops=flops, transcendentals=0,
            bytes_accessed=(m_p * d_in_p * x_bytes
                            + grid_i * (weight_bytes + bias_bytes)  # re-streamed per row tile
                            + m_p * d_out_p * o_bytes))
        out = pl.pallas_call(
            _mlp_kernel_stream,
            out_shape=jax.ShapeDtypeStruct((m_p, d_out_p), out_dtype),
            grid_spec=pltpu.PrefetchScalarGridSpec(
                num_scalar_prefetch=0,
                grid=(grid_i, grid_k),
                in_specs=[
                    pl.BlockSpec((tm_eff, d_in_p), lambda i, k: (i, 0)),   # x rows
                    pl.BlockSpec((d_in_p, tk_eff), lambda i, k: (0, k)),   # W1 slice
                    pl.BlockSpec((1, tk_eff), lambda i, k: (0, k)),        # b1 slice
                    pl.BlockSpec((tk_eff, d_out_p), lambda i, k: (k, 0)),  # W2 slice
                    pl.BlockSpec((1, d_out_p), lambda i, k: (0, 0)),       # b2
                ],
                out_specs=pl.BlockSpec((tm_eff, d_out_p), lambda i, k: (i, 0)),
                scratch_shapes=[pltpu.VMEM((tm_eff, d_out_p), jnp.float32)],
            ),
            compiler_params=pltpu.CompilerParams(
                dimension_semantics=("parallel", "arbitrary"),
                vmem_limit_bytes=vmem_limit),
            cost_estimate=cost,
        )(x2p, w1t, b1r, w2t, b2r)

    return out[:m, :d_out].reshape(*lead, d_out)


def mlp_forward(x, w1, b1, w2, b2, **kwargs):
    """Convenience wrapper (preps weights per call; prefer prepare_mlp_params
    + mlp_apply when calling repeatedly)."""
    return mlp_apply(x, prepare_mlp_params(w1, b1, w2, b2), **kwargs)


# ------------------------------- demo --------------------------------------

if __name__ == "__main__":
    # Small shapes consistent with the module: batch=2, seq=8.
    batch, seq = 2, 8
    input_size, hidden_size = 32, 64
    output_size = input_size  # output_size=None in the module -> input_size

    key = jax.random.PRNGKey(0)
    kx, kw1, kb1, kw2, kb2 = jax.random.split(key, 5)

    x = jax.random.normal(kx, (batch, seq, input_size), dtype=jnp.float32)

    # PyTorch nn.Linear parameter shapes: (out, in) weight + (out,) bias.
    bound1 = 1.0 / (input_size ** 0.5)
    w1 = jax.random.uniform(kw1, (hidden_size, input_size),
                            minval=-bound1, maxval=bound1, dtype=jnp.float32)
    b1 = jax.random.uniform(kb1, (hidden_size,),
                            minval=-bound1, maxval=bound1, dtype=jnp.float32)
    bound2 = 1.0 / (hidden_size ** 0.5)
    w2 = jax.random.uniform(kw2, (output_size, hidden_size),
                            minval=-bound2, maxval=bound2, dtype=jnp.float32)
    b2 = jax.random.uniform(kb2, (output_size,),
                            minval=-bound2, maxval=bound2, dtype=jnp.float32)

    # One-time weight prep (pad/transpose/cast hoisted out of the forward path).
    params = prepare_mlp_params(w1, b1, w2, b2)

    # Reference 1: same bf16-operand / f32-accumulate math (tight tolerance).
    xb = x.reshape(-1, input_size).astype(jnp.bfloat16)
    h_ref = jnp.maximum(
        jnp.dot(xb, w1.T.astype(jnp.bfloat16),
                preferred_element_type=jnp.float32) + b1, 0.0)
    ref_bf16 = (jnp.dot(h_ref.astype(jnp.bfloat16), w2.T.astype(jnp.bfloat16),
                        preferred_element_type=jnp.float32) + b2
                ).reshape(batch, seq, output_size)
    # Reference 2: full f32 math (loose tolerance covers bf16 rounding).
    ref_f32 = jnp.maximum(x @ w1.T + b1, 0.0) @ w2.T + b2

    # Auto path (resident-weights fast path at these sizes).
    out = jax.block_until_ready(mlp_apply(x, params))
    assert out.shape == (batch, seq, output_size)
    assert jnp.allclose(out, ref_bf16, atol=1e-4, rtol=1e-4)
    assert jnp.allclose(out, ref_f32, atol=5e-2, rtol=5e-2)

    # Forced streaming path (hidden-axis grid + f32 accumulator, bias-init).
    out_s = jax.block_until_ready(mlp_apply(x, params, force_streaming=True))
    assert jnp.allclose(out_s, ref_bf16, atol=1e-4, rtol=1e-4)

    # Streaming path with multiple hidden tiles (hidden=256, tk=128) to
    # exercise the accumulator across k steps.
    hidden2 = 256
    kw3, kb3, kw4, kb4 = jax.random.split(jax.random.PRNGKey(1), 4)
    bnd3 = 1.0 / (input_size ** 0.5)
    w3 = jax.random.uniform(kw3, (hidden2, input_size),
                            minval=-bnd3, maxval=bnd3, dtype=jnp.float32)
    b3 = jax.random.uniform(kb3, (hidden2,),
                            minval=-bnd3, maxval=bnd3, dtype=jnp.float32)
    bnd4 = 1.0 / (hidden2 ** 0.5)
    w4 = jax.random.uniform(kw4, (output_size, hidden2),
                            minval=-bnd4, maxval=bnd4, dtype=jnp.float32)
    b4 = jax.random.uniform(kb4, (output_size,),
                            minval=-bnd4, maxval=bnd4, dtype=jnp.float32)
    params2 = prepare_mlp_params(w3, b3, w4, b4, tk=128)
    out2 = jax.block_until_ready(mlp_apply(x, params2, force_streaming=True))
    ref2 = jnp.maximum(x @ w3.T + b3, 0.0) @ w4.T + b4
    assert jnp.allclose(out2, ref2, atol=5e-2, rtol=5e-2)

    print("KERNEL_OK")
</pallas_src>

<mosaic_0001>
module attributes {stable_mosaic.version = 11 : i64} {
  func.func @_mlp_kernel_resident(%arg0: i32, %arg1: memref<16x128xf32, #tpu.memory_space<vmem>>, %arg2: memref<128x128xbf16, #tpu.memory_space<vmem>>, %arg3: memref<1x128xf32, #tpu.memory_space<vmem>>, %arg4: memref<128x128xbf16, #tpu.memory_space<vmem>>, %arg5: memref<1x128xf32, #tpu.memory_space<vmem>>, %arg6: memref<16x128xf32, #tpu.memory_space<vmem>>) attributes {dimension_semantics = [#tpu.dimension_semantics<parallel>], iteration_bounds = array<i64: 1>, scalar_prefetch = 0 : i64, scratch_operands = 0 : i64, tpu.core_type = #tpu.core_type<tc>, window_params = [{transform_indices = @transform_0, window_bounds = array<i64: 16, 128>}, {pipeline_mode = #tpu.pipeline_mode<synchronous>, transform_indices = @transform_1, window_bounds = array<i64: 128, 128>}, {pipeline_mode = #tpu.pipeline_mode<synchronous>, transform_indices = @transform_2, window_bounds = array<i64: 1, 128>}, {pipeline_mode = #tpu.pipeline_mode<synchronous>, transform_indices = @transform_3, window_bounds = array<i64: 128, 128>}, {pipeline_mode = #tpu.pipeline_mode<synchronous>, transform_indices = @transform_4, window_bounds = array<i64: 1, 128>}, {transform_indices = @transform_5, window_bounds = array<i64: 16, 128>}]} {
    %c0 = arith.constant 0 : index
    %c0_0 = arith.constant 0 : index
    %0 = vector.load %arg1[%c0, %c0_0] : memref<16x128xf32, #tpu.memory_space<vmem>>, vector<16x128xf32>
    %1 = arith.truncf %0 : vector<16x128xf32> to vector<16x128xbf16>
    %c0_1 = arith.constant 0 : index
    %c0_2 = arith.constant 0 : index
    %2 = vector.load %arg2[%c0_1, %c0_2] : memref<128x128xbf16, #tpu.memory_space<vmem>>, vector<128x128xbf16>
    %cst = arith.constant dense<0.000000e+00> : vector<16x128xf32>
    %3 = tpu.matmul %1, %2, %cst {dimension_numbers = #tpu.dot_dimension_numbers<[1], [0], [0], [1], [0, 0, 1, 1], [], []>} : vector<16x128xbf16>, vector<128x128xbf16>, vector<16x128xf32> -> vector<16x128xf32>
    %c0_3 = arith.constant 0 : index
    %c0_4 = arith.constant 0 : index
    %4 = vector.load %arg3[%c0_3, %c0_4] : memref<1x128xf32, #tpu.memory_space<vmem>>, vector<1x128xf32>
    %5 = vector.broadcast %4 : vector<1x128xf32> to vector<16x128xf32>
    %6 = arith.addf %3, %5 : vector<16x128xf32>
    %cst_5 = arith.constant 0.000000e+00 : f32
    %7 = vector.broadcast %cst_5 : f32 to vector<16x128xf32>
    %8 = arith.maximumf %6, %7 : vector<16x128xf32>
    %9 = arith.truncf %8 : vector<16x128xf32> to vector<16x128xbf16>
    %c0_6 = arith.constant 0 : index
    %c0_7 = arith.constant 0 : index
    %10 = vector.load %arg4[%c0_6, %c0_7] : memref<128x128xbf16, #tpu.memory_space<vmem>>, vector<128x128xbf16>
    %cst_8 = arith.constant dense<0.000000e+00> : vector<16x128xf32>
    %11 = tpu.matmul %9, %10, %cst_8 {dimension_numbers = #tpu.dot_dimension_numbers<[1], [0], [0], [1], [0, 0, 1, 1], [], []>} : vector<16x128xbf16>, vector<128x128xbf16>, vector<16x128xf32> -> vector<16x128xf32>
    %c0_9 = arith.constant 0 : index
    %c0_10 = arith.constant 0 : index
    %12 = vector.load %arg5[%c0_9, %c0_10] : memref<1x128xf32, #tpu.memory_space<vmem>>, vector<1x128xf32>
    %13 = vector.broadcast %12 : vector<1x128xf32> to vector<16x128xf32>
    %14 = arith.addf %11, %13 : vector<16x128xf32>
    %c0_11 = arith.constant 0 : index
    %c0_12 = arith.constant 0 : index
    %15 = vector.load %arg6[%c0_11, %c0_12] : memref<16x128xf32, #tpu.memory_space<vmem>>, vector<16x128xf32>
    tpu.vector_store %arg6[%c0_11, %c0_12], %14 {strides = array<i32>} : memref<16x128xf32, #tpu.memory_space<vmem>>, vector<16x128xf32>,
    return
  }
  func.func @transform_0(%arg0: i32) -> (i32, i32) {
    %c0_i32 = arith.constant 0 : i32
    %c0_i32_0 = arith.constant 0 : i32
    return %arg0, %c0_i32 : i32, i32
  }
  func.func @transform_1(%arg0: i32) -> (i32, i32) {
    %c0_i32 = arith.constant 0 : i32
    %c0_i32_0 = arith.constant 0 : i32
    %c0_i32_1 = arith.constant 0 : i32
    return %c0_i32, %c0_i32_0 : i32, i32
  }
  func.func @transform_2(%arg0: i32) -> (i32, i32) {
    %c0_i32 = arith.constant 0 : i32
    %c0_i32_0 = arith.constant 0 : i32
    %c0_i32_1 = arith.constant 0 : i32
    return %c0_i32, %c0_i32_0 : i32, i32
  }
  func.func @transform_3(%arg0: i32) -> (i32, i32) {
    %c0_i32 = arith.constant 0 : i32
    %c0_i32_0 = arith.constant 0 : i32
    %c0_i32_1 = arith.constant 0 : i32
    return %c0_i32, %c0_i32_0 : i32, i32
  }
  func.func @transform_4(%arg0: i32) -> (i32, i32) {
    %c0_i32 = arith.constant 0 : i32
    %c0_i32_0 = arith.constant 0 : i32
    %c0_i32_1 = arith.constant 0 : i32
    return %c0_i32, %c0_i32_0 : i32, i32
  }
  func.func @transform_5(%arg0: i32) -> (i32, i32) {
    %c0_i32 = arith.constant 0 : i32
    %c0_i32_0 = arith.constant 0 : i32
    return %arg0, %c0_i32 : i32, i32
  }
}

</mosaic_0001>

<llo_original>
// kernel: tpu_custom_call.1
$region0: #{tpu_custom_call.1}
  #allocation0 [shape = 'u32[]', space=smem, size = 0x4, offset = 0x4, fixed_abs, tag = 'smem constant byte address 0x4 - core index']
  #allocation1 [shape = 'u32[72,128]{1,0:T(1,128)}', space=vmem, size = 0x9000, scoped, tag = 'internal scratch']
  %s0 = inlined_call_operand.hbm [shape: f32[16,128], index: 0, kind: input, shape index: {}]
  %s1 = inlined_call_operand.hbm [shape: bf16[128,128], index: 1, kind: input, shape index: {}]
  %s2 = inlined_call_operand.vmem [shape: f32[1,128], index: 2, kind: input, shape index: {}]
  %s3 = inlined_call_operand.hbm [shape: bf16[128,128], index: 3, kind: input, shape index: {}]
  %s4 = inlined_call_operand.vmem [shape: f32[1,128], index: 4, kind: input, shape index: {}]
  %s5 = inlined_call_operand.hbm [shape: f32[16,128], index: 5, kind: output, shape index: {}]
  %s6 = sld [smem:[#allocation0]]
  $region42: #{tpu_custom_call.1} parent=0
    _
  %s8 = ssub.s32 1, %s6
  %s9 = scalar_select 0, %s8, %s6
  $region1: #{tpu_custom_call.1} parent=0
    #allocation2 [shape = 'u8[8192]{0}', space=vmem, size = 0x2000, scoped, tag = 'input window, operand 0, single buffered']
    #allocation3 [shape = 's32[1]{0}', space=sflag, size = 0x4, scoped, tag = 'scoped memory for tpu_custom_call.1']
    #allocation4 [shape = 's32[1]{0}', space=sflag, size = 0x4, scoped, tag = 'scoped memory for tpu_custom_call.1']
    #allocation5 [shape = 'u8[32768]{0}', space=vmem, size = 0x8000, scoped, tag = 'input window, operand 1, single buffered']
    #allocation6 [shape = 's32[1]{0}', space=sflag, size = 0x4, scoped, tag = 'scoped memory for tpu_custom_call.1']
    #allocation7 [shape = 'u8[32768]{0}', space=vmem, size = 0x8000, scoped, tag = 'input window, operand 3, single buffered']
    #allocation8 [shape = 'u8[8192]{0}', space=vmem, size = 0x2000, scoped, tag = 'output window, operand 0, single buffered']
    %10 = vsyncpa [#allocation3], 0
    %11 = vsyncpa [#allocation6], 0
    %12 = vsyncpa [#allocation4], 0
    // Predicated region
    $region2: #{tpu_custom_call.1} parent=1 // pred_check
      _
    $region3: #{tpu_custom_call.1} parent=1 // pred_check_branch
      %14 = sbr.rel (0) target = $region5
    $region4: #{tpu_custom_call.1} parent=1 // pred_region
      %16 = vsyncadd [#allocation3], 0
      %s17 = sshll.u32 %s0, 4
      %s18 = int_to_ptr.hbm [resolvable:$true] %s17
      %s19 = sshll.u32 [#allocation2], 4
      %s20 = int_to_ptr.vmem [resolvable:$true] %s19
      %25 = dma.hbm_to_vmem [thread:$0]  %s18, 256, %s20, [#allocation3], 128, 128, 8
    $region5: #{tpu_custom_call.1} parent=1 // pred_fallthru
      _
    // Predicated region
    $region6: #{tpu_custom_call.1} parent=1 // pred_check
      _
    $region7: #{tpu_custom_call.1} parent=1 // pred_check_branch
      %27 = sbr.rel (0) target = $region9
    $region8: #{tpu_custom_call.1} parent=1 // pred_region
      %29 = vsyncadd [#allocation6], 0
      %s30 = sshll.u32 %s1, 4
      %s31 = int_to_ptr.hbm [resolvable:$true] %s30
      %s32 = sshll.u32 [#allocation5], 4
      %s33 = int_to_ptr.vmem [resolvable:$true] %s32
      %38 = dma.hbm_to_vmem [thread:$0]  %s31, 1024, %s33, [#allocation6], 64, 64, 4
    $region9: #{tpu_custom_call.1} parent=1 // pred_fallthru
      _
    // Predicated region
    $region10: #{tpu_custom_call.1} parent=1 // pred_check
      _
    $region11: #{tpu_custom_call.1} parent=1 // pred_check_branch
      %40 = sbr.rel (0) target = $region13
    $region12: #{tpu_custom_call.1} parent=1 // pred_region
      _
    $region13: #{tpu_custom_call.1} parent=1 // pred_fallthru
      _
    // Predicated region
    $region14: #{tpu_custom_call.1} parent=1 // pred_check
      _
    $region15: #{tpu_custom_call.1} parent=1 // pred_check_branch
      %42 = sbr.rel (0) target = $region17
    $region16: #{tpu_custom_call.1} parent=1 // pred_region
      %44 = vsyncadd [#allocation6], 0
      %s45 = sshll.u32 %s3, 4
      %s46 = int_to_ptr.hbm [resolvable:$true] %s45
      %s47 = sshll.u32 [#allocation7], 4
      %s48 = int_to_ptr.vmem [resolvable:$true] %s47
      %53 = dma.hbm_to_vmem [thread:$0]  %s46, 1024, %s48, [#allocation6], 64, 64, 4
    $region17: #{tpu_custom_call.1} parent=1 // pred_fallthru
      _
    // Predicated region
    $region18: #{tpu_custom_call.1} parent=1 // pred_check
      _
    $region19: #{tpu_custom_call.1} parent=1 // pred_check_branch
      %55 = sbr.rel (0) target = $region21
    $region20: #{tpu_custom_call.1} parent=1 // pred_region
      _
    $region21: #{tpu_custom_call.1} parent=1 // pred_fallthru
      _
    // Predicated region
    $region22: #{tpu_custom_call.1} parent=1 // pred_check
      _
    $region23: #{tpu_custom_call.1} parent=1 // pred_check_branch
      %57 = sbr.rel (0) target = $region25
    $region24: #{tpu_custom_call.1} parent=1 // pred_region
      %59 = dma.done [#allocation3], 256
    $region25: #{tpu_custom_call.1} parent=1 // pred_fallthru
      _
    // Predicated region
    $region26: #{tpu_custom_call.1} parent=1 // pred_check
      _
    $region27: #{tpu_custom_call.1} parent=1 // pred_check_branch
      %61 = sbr.rel (0) target = $region29
    $region28: #{tpu_custom_call.1} parent=1 // pred_region
      %63 = dma.done [#allocation6], 1024
    $region29: #{tpu_custom_call.1} parent=1 // pred_fallthru
      _
    // Predicated region
    $region30: #{tpu_custom_call.1} parent=1 // pred_check
      _
    $region31: #{tpu_custom_call.1} parent=1 // pred_check_branch
      %65 = sbr.rel (0) target = $region33
    $region32: #{tpu_custom_call.1} parent=1 // pred_region
      %67 = dma.done [#allocation6], 1024
    $region33: #{tpu_custom_call.1} parent=1 // pred_fallthru
      _
    %v68 = vld [vmem:[#allocation2] sm:$0xff]
    %v69 = vld [vmem:[#allocation2 + $0x8] sm:$0xff]
    %v70 = vpack.c.bf16 %v69, %v68
    %v71 = vld [vmem:[#allocation5] sm:$0xf]
    %v72 = vld [vmem:[#allocation5 + $0x4] sm:$0xf]
    %v73 = vld [vmem:[#allocation5 + $0x8] sm:$0xf]
    %v74 = vld [vmem:[#allocation5 + $0xc] sm:$0xf]
    %v75 = vld [vmem:[#allocation5 + $0x10] sm:$0xf]
    %v76 = vld [vmem:[#allocation5 + $0x14] sm:$0xf]
    %v77 = vld [vmem:[#allocation5 + $0x18] sm:$0xf]
    %v78 = vld [vmem:[#allocation5 + $0x1c] sm:$0xf]
    %v79 = vld [vmem:[#allocation5 + $0x20] sm:$0xf]
    %v80 = vld [vmem:[#allocation5 + $0x24] sm:$0xf]
    %v81 = vld [vmem:[#allocation5 + $0x28] sm:$0xf]
    %v82 = vld [vmem:[#allocation5 + $0x2c] sm:$0xf]
    %v83 = vld [vmem:[#allocation5 + $0x30] sm:$0xf]
    %v84 = vld [vmem:[#allocation5 + $0x34] sm:$0xf]
    %v85 = vld [vmem:[#allocation5 + $0x38] sm:$0xf]
    %v86 = vld [vmem:[#allocation5 + $0x3c] sm:$0xf]
    %v87 = vld [vmem:[%s2] sm:$0x1]
    %v89 = vperm.slane %v87, 0
    %v107 = vunpack.c.l.b16 %v71
    %v108 = vunpack.c.l.b16 %v72
    %v109 = vunpack.c.l.b16 %v73
    %v110 = vunpack.c.l.b16 %v74
    %v111 = vunpack.c.l.b16 %v75
    %v112 = vunpack.c.l.b16 %v76
    %v113 = vunpack.c.l.b16 %v77
    %v114 = vunpack.c.l.b16 %v78
    %v115 = vunpack.c.l.b16 %v79
    %v116 = vunpack.c.l.b16 %v80
    %v117 = vunpack.c.l.b16 %v81
    %v118 = vunpack.c.l.b16 %v82
    %v119 = vunpack.c.l.b16 %v83
    %v120 = vunpack.c.l.b16 %v84
    %v121 = vunpack.c.l.b16 %v85
    %v122 = vunpack.c.l.b16 %v86
    %v123 = vpack.c.b16 %v108, %v107
    %v124 = vpack.c.b16 %v110, %v109
    %v125 = vpack.c.b16 %v112, %v111
    %v126 = vpack.c.b16 %v114, %v113
    %v127 = vpack.c.b16 %v116, %v115
    %v128 = vpack.c.b16 %v118, %v117
    %v129 = vpack.c.b16 %v120, %v119
    %v130 = vpack.c.b16 %v122, %v121
    %139 = vmatpush.bf16.msra.mxu0 %v130
    %140 = vmatpush.bf16.msra.mxu0 %v129
    %141 = vmatpush.bf16.msra.mxu0 %v128
    %142 = vmatpush.bf16.msra.mxu0 %v127
    %143 = vmatpush.bf16.msra.mxu0 %v126
    %144 = vmatpush.bf16.msra.mxu0 %v125
    %145 = vmatpush.bf16.msra.mxu0 %v124
    %146 = vmatpush.bf16.msra.mxu0 %v123
    %147 = vmatmul.bf16.gmra.mxu0 %v70
    %v148 = vpop.f32.mrf.mxu0
    %v149 = vadd.f32 %v89, %v148
    %v150 = vpop.f32.mrf.mxu0
    %v151 = vadd.f32 %v89, %v150
    %152 = vdwg.mxu0
    %v153 = vmax.f32 %v149, 0.0
    %v154 = vmax.f32 %v151, 0.0
    %v155 = vpack.c.bf16 %v154, %v153
    %v156 = vld [vmem:[#allocation7] sm:$0xf]
    %v157 = vld [vmem:[#allocation7 + $0x4] sm:$0xf]
    %v158 = vld [vmem:[#allocation7 + $0x8] sm:$0xf]
    %v159 = vld [vmem:[#allocation7 + $0xc] sm:$0xf]
    %v160 = vld [vmem:[#allocation7 + $0x10] sm:$0xf]
    %v161 = vld [vmem:[#allocation7 + $0x14] sm:$0xf]
    %v162 = vld [vmem:[#allocation7 + $0x18] sm:$0xf]
    %v163 = vld [vmem:[#allocation7 + $0x1c] sm:$0xf]
    %v164 = vld [vmem:[#allocation7 + $0x20] sm:$0xf]
    %v165 = vld [vmem:[#allocation7 + $0x24] sm:$0xf]
    %v166 = vld [vmem:[#allocation7 + $0x28] sm:$0xf]
    %v167 = vld [vmem:[#allocation7 + $0x2c] sm:$0xf]
    %v168 = vld [vmem:[#allocation7 + $0x30] sm:$0xf]
    %v169 = vld [vmem:[#allocation7 + $0x34] sm:$0xf]
    %v170 = vld [vmem:[#allocation7 + $0x38] sm:$0xf]
    %v171 = vld [vmem:[#allocation7 + $0x3c] sm:$0xf]
    %v172 = vld [vmem:[%s4] sm:$0x1]
    %v174 = vperm.slane %v172, 0
    %v192 = vunpack.c.l.b16 %v156
    %v193 = vunpack.c.l.b16 %v157
    %v194 = vunpack.c.l.b16 %v158
    %v195 = vunpack.c.l.b16 %v159
    %v196 = vunpack.c.l.b16 %v160
    %v197 = vunpack.c.l.b16 %v161
    %v198 = vunpack.c.l.b16 %v162
    %v199 = vunpack.c.l.b16 %v163
    %v200 = vunpack.c.l.b16 %v164
    %v201 = vunpack.c.l.b16 %v165
    %v202 = vunpack.c.l.b16 %v166
    %v203 = vunpack.c.l.b16 %v167
    %v204 = vunpack.c.l.b16 %v168
    %v205 = vunpack.c.l.b16 %v169
    %v206 = vunpack.c.l.b16 %v170
    %v207 = vunpack.c.l.b16 %v171
    %v208 = vpack.c.b16 %v193, %v192
    %v209 = vpack.c.b16 %v195, %v194
    %v210 = vpack.c.b16 %v197, %v196
    %v211 = vpack.c.b16 %v199, %v198
    %v212 = vpack.c.b16 %v201, %v200
    %v213 = vpack.c.b16 %v203, %v202
    %v214 = vpack.c.b16 %v205, %v204
    %v215 = vpack.c.b16 %v207, %v206
    %224 = vmatpush.bf16.msra.mxu0 %v215
    %225 = vmatpush.bf16.msra.mxu0 %v214
    %226 = vmatpush.bf16.msra.mxu0 %v213
    %227 = vmatpush.bf16.msra.mxu0 %v212
    %228 = vmatpush.bf16.msra.mxu0 %v211
    %229 = vmatpush.bf16.msra.mxu0 %v210
    %230 = vmatpush.bf16.msra.mxu0 %v209
    %231 = vmatpush.bf16.msra.mxu0 %v208
    %232 = vmatmul.bf16.gmra.mxu0 %v155
    %v233 = vpop.f32.mrf.mxu0
    %v234 = vadd.f32 %v174, %v233
    %v235 = vpop.f32.mrf.mxu0
    %v236 = vadd.f32 %v174, %v235
    %237 = vdwg.mxu0
    %238 = vst [vmem:[#allocation8] sm:$0xff] %v234
    %239 = vst [vmem:[#allocation8 + $0x8] sm:$0xff] %v236
    // Predicated region
    $region34: #{tpu_custom_call.1} parent=1 // pred_check
      _
    $region35: #{tpu_custom_call.1} parent=1 // pred_check_branch
      %241 = sbr.rel (0) target = $region37
    $region36: #{tpu_custom_call.1} parent=1 // pred_region
      %243 = vsyncadd [#allocation4], 0
      %s244 = sshll.u32 [#allocation8], 4
      %s245 = int_to_ptr.vmem [resolvable:$true] %s244
      %s246 = sshll.u32 %s5, 4
      %s247 = int_to_ptr.hbm [resolvable:$true] %s246
      %252 = dma.vmem_to_hbm [thread:$0]  %s245, 256, %s247, [#allocation4], 128, 128, 8
    $region37: #{tpu_custom_call.1} parent=1 // pred_fallthru
      _
    // Predicated region
    $region38: #{tpu_custom_call.1} parent=1 // pred_check
      _
    $region39: #{tpu_custom_call.1} parent=1 // pred_check_branch
      %254 = sbr.rel (0) target = $region41
    $region40: #{tpu_custom_call.1} parent=1 // pred_region
      %256 = dma.done [#allocation4], 256
    $region41: #{tpu_custom_call.1} parent=1 // pred_fallthru
      _
    %257 = vsyncpa [#allocation3], 1
    %258 = vsyncpa [#allocation6], 1
    %259 = vsyncpa [#allocation4], 1

</llo_original>
